<compile_context>
chip_gen: v7x
topology: tpu7x:2x2x1
jax: 0.10.0
libtpu: 0.0.40
codegen_flags: <defaults>
</compile_context>

<pallas_src>
import math

import jax
import jax.numpy as jnp
import numpy as np
from jax.experimental import pallas as pl
from jax.experimental.pallas import tpu as pltpu

_LANE_CANDIDATES = (4096, 2048, 1024, 512, 256, 128)
_TARGET_BLOCK_BYTES = 8 * 1024 * 1024      # per-input block (x2 in + x2 out bufs)
_VMEM_LIMIT_BYTES = 48 * 1024 * 1024       # fits v5e/v6e (128 MiB) and v7x (64 MiB)


def _scale_kernel(w_ref, x_ref, o_ref):
    # out = x * w ; w is a single f32 scalar in SMEM, cast once to x's dtype so
    # bf16 inputs stay bf16 on the VALU (no whole-tile f32 promotion).
    w = w_ref[0].astype(x_ref.dtype)
    o_ref[...] = x_ref[...] * w


def _sublane_multiple(dtype):
    # Packed-sublane multiple: 8 for f32, 16 for bf16, 32 for int8/fp8.
    return max(8, 32 // jnp.dtype(dtype).itemsize)


def _plan(total, dtype):
    """Pick (lanes, rows, tile_rows, padded_total) for a lane-dense layout."""
    elem_bytes = jnp.dtype(dtype).itemsize
    sub = _sublane_multiple(dtype)

    # 1) lanes: largest multiple-of-128 divisor of `total` -> zero-copy reshape.
    lanes = 128
    if total % 128 == 0:
        for cand in _LANE_CANDIDATES:
            if total % cand == 0:
                lanes = cand
                break
    rows = pl.cdiv(total, lanes)            # ragged sizes pad only the tail row

    # 2) row tile targeting ~8 MiB per input block.
    max_tile_rows = max(sub, ((_TARGET_BLOCK_BYTES // (lanes * elem_bytes)) // sub) * sub)

    if rows <= max_tile_rows:
        if rows % (2 * sub) == 0:
            tile_rows = rows // 2           # 2 balanced tiles -> both v7x TCs busy
        else:
            tile_rows = rows                # single full-extent block (always legal)
    else:
        # Prefer a tile size that divides rows exactly (no row padding, no
        # partial edge block).  Keep blocks >= ~1/8 of the target so per-step
        # overhead stays negligible.
        floor = max(sub, ((max_tile_rows // 8) // sub) * sub)
        tile_rows = 0
        t = max_tile_rows
        while t >= floor:
            if rows % t == 0:
                tile_rows = t
                break
            t -= sub
        if tile_rows == 0:
            # Rare ragged row count: pad rows up to a multiple of the tile.
            tile_rows = max_tile_rows
            rows = pl.cdiv(rows, tile_rows) * tile_rows

    return lanes, rows, tile_rows, rows * lanes


def _annealing_weight(step, n_freqs, annealed_step, annealed_begin_step):
    """Scalar annealing weight for the last frequency (j = N_freqs - 1), f32."""
    step_f = jnp.asarray(step, dtype=jnp.float32)
    if annealed_begin_step == 0:
        alpha = n_freqs * step_f / float(annealed_step)
    else:
        alpha = jnp.where(
            step_f <= float(annealed_begin_step),
            jnp.float32(0.0),
            n_freqs * (step_f - float(annealed_begin_step)) / float(annealed_step),
        )
    t = jnp.clip(alpha - jnp.float32(n_freqs - 1), 0.0, 1.0)
    return 0.5 * (1.0 - jnp.cos(jnp.float32(math.pi) * t))


def annealed_embedding(x, step, *, n_freqs, annealed_step, annealed_begin_step=0):
    """x: (B, in_channels); step: scalar. Returns x * w_last, shape (B, in_channels)."""
    B, C = x.shape
    total = B * C

    # Hoisted scalar weight (one cos total, computed outside the kernel).
    w = _annealing_weight(step, n_freqs, annealed_step, annealed_begin_step)
    w_arr = jnp.reshape(w, (1,)).astype(jnp.float32)

    lanes, rows, tile_rows, padded_total = _plan(total, x.dtype)

    x_flat = jnp.reshape(x, (-1,))
    if padded_total != total:                     # only for ragged sizes
        x_flat = jnp.pad(x_flat, (0, padded_total - total))
    x2d = jnp.reshape(x_flat, (rows, lanes))

    grid = (rows // tile_rows,)

    out2d = pl.pallas_call(
        _scale_kernel,
        out_shape=jax.ShapeDtypeStruct((rows, lanes), x.dtype),
        grid=grid,
        in_specs=[
            pl.BlockSpec(memory_space=pltpu.MemorySpace.SMEM),   # scalar weight
            pl.BlockSpec((tile_rows, lanes), lambda i: (i, 0)),  # x row-tile
        ],
        out_specs=pl.BlockSpec((tile_rows, lanes), lambda i: (i, 0)),
        compiler_params=pltpu.CompilerParams(
            dimension_semantics=("parallel",),
            vmem_limit_bytes=_VMEM_LIMIT_BYTES,
        ),
    )(w_arr, x2d)

    out_flat = jnp.reshape(out2d, (-1,))
    if padded_total != total:
        out_flat = out_flat[:total]
    return jnp.reshape(out_flat, (B, C))


def _reference_numpy(x, step, n_freqs, annealed_step, annealed_begin_step=0):
    """Faithful numpy port of the PyTorch forward (returns x * w_last)."""
    if annealed_begin_step == 0:
        alpha = n_freqs * step / float(annealed_step)
    elif step <= annealed_begin_step:
        alpha = 0.0
    else:
        alpha = n_freqs * (step - annealed_begin_step) / float(annealed_step)
    j = n_freqs - 1
    w = (1.0 - np.cos(math.pi * np.clip(alpha - j, 0.0, 1.0))) / 2.0
    return x * np.float32(w)


if __name__ == "__main__":
    N_freqs = 4
    annealed_step = 1000

    # Case 1: small ragged batch (B*C not 128-aligned -> tail-pad fallback path).
    B1, C1, step1 = 8, 3, 900
    x1 = jax.random.normal(jax.random.PRNGKey(0), (B1, C1), dtype=jnp.float32)
    out1 = jax.block_until_ready(annealed_embedding(
        x1, step1, n_freqs=N_freqs, annealed_step=annealed_step,
        annealed_begin_step=0))
    ref1 = _reference_numpy(np.asarray(x1), step1, N_freqs, annealed_step, 0)
    np.testing.assert_allclose(np.asarray(out1), ref1, rtol=1e-5, atol=1e-6)

    # Case 2: 128-aligned total (zero-copy layout path, no pad / no slice).
    B2, C2, step2 = 256, 4, 950
    x2 = jax.random.normal(jax.random.PRNGKey(0), (B2, C2), dtype=jnp.float32)
    out2 = jax.block_until_ready(annealed_embedding(
        x2, step2, n_freqs=N_freqs, annealed_step=annealed_step,
        annealed_begin_step=0))
    ref2 = _reference_numpy(np.asarray(x2), step2, N_freqs, annealed_step, 0)
    np.testing.assert_allclose(np.asarray(out2), ref2, rtol=1e-5, atol=1e-6)

    # Case 3: annealed_begin_step > 0 branch (step before the anneal begins).
    B3, C3, step3, begin3 = 8, 3, 50, 100
    x3 = jax.random.normal(jax.random.PRNGKey(0), (B3, C3), dtype=jnp.float32)
    out3 = jax.block_until_ready(annealed_embedding(
        x3, step3, n_freqs=N_freqs, annealed_step=annealed_step,
        annealed_begin_step=begin3))
    ref3 = _reference_numpy(np.asarray(x3), step3, N_freqs, annealed_step, begin3)
    np.testing.assert_allclose(np.asarray(out3), ref3, rtol=1e-5, atol=1e-6)

    print("KERNEL_OK")
</pallas_src>

<mosaic_0001>
module attributes {stable_mosaic.version = 11 : i64} {
  func.func @_scale_kernel(%arg0: i32, %arg1: memref<1xf32, #tpu.memory_space<smem>>, %arg2: memref<1x128xf32, #tpu.memory_space<vmem>>, %arg3: memref<1x128xf32, #tpu.memory_space<vmem>>) attributes {dimension_semantics = [#tpu.dimension_semantics<parallel>], iteration_bounds = array<i64: 1>, scalar_prefetch = 0 : i64, scratch_operands = 0 : i64, tpu.core_type = #tpu.core_type<tc>, window_params = [{transform_indices = @transform_0, window_bounds = array<i64: 1>}, {transform_indices = @transform_1, window_bounds = array<i64: 1, 128>}, {transform_indices = @transform_2, window_bounds = array<i64: 1, 128>}]} {
    %c0 = arith.constant 0 : index
    %0 = memref.load %arg1[%c0] : memref<1xf32, #tpu.memory_space<smem>>
    %c0_0 = arith.constant 0 : index
    %c0_1 = arith.constant 0 : index
    %1 = vector.load %arg2[%c0_0, %c0_1] : memref<1x128xf32, #tpu.memory_space<vmem>>, vector<1x128xf32>
    %2 = vector.broadcast %0 : f32 to vector<1x128xf32>
    %3 = arith.mulf %1, %2 : vector<1x128xf32>
    %c0_2 = arith.constant 0 : index
    %c0_3 = arith.constant 0 : index
    %4 = vector.load %arg3[%c0_2, %c0_3] : memref<1x128xf32, #tpu.memory_space<vmem>>, vector<1x128xf32>
    tpu.vector_store %arg3[%c0_2, %c0_3], %3 {strides = array<i32>} : memref<1x128xf32, #tpu.memory_space<vmem>>, vector<1x128xf32>,
    return
  }
  func.func @transform_0(%arg0: i32) -> i32 {
    %c0_i32 = arith.constant 0 : i32
    %c0_i32_0 = arith.constant 0 : i32
    return %c0_i32 : i32
  }
  func.func @transform_1(%arg0: i32) -> (i32, i32) {
    %c0_i32 = arith.constant 0 : i32
    %c0_i32_0 = arith.constant 0 : i32
    return %arg0, %c0_i32 : i32, i32
  }
  func.func @transform_2(%arg0: i32) -> (i32, i32) {
    %c0_i32 = arith.constant 0 : i32
    %c0_i32_0 = arith.constant 0 : i32
    return %arg0, %c0_i32 : i32, i32
  }
}

</mosaic_0001>

<llo_original>
// kernel: tpu_custom_call.1
$region0: #{tpu_custom_call.1}
  #allocation0 [shape = 'u32[]', space=smem, size = 0x4, offset = 0x4, fixed_abs, tag = 'smem constant byte address 0x4 - core index']
  #allocation1 [shape = 'u32[144,128]{1,0:T(1,128)}', space=vmem, size = 0x12000, scoped, tag = 'internal scratch']
  #allocation2 [shape = 'f32[1]{0:T(128)S(6)}', space=smem, size = 0x200, scoped, tag = 'scoped memory for tpu_custom_call.1']
  %s0 = inlined_call_operand.<no memory space> [shape: f32[1], index: 0, kind: input, shape index: {}]
  %s1 = inlined_call_operand.vmem [shape: f32[1,128], index: 1, kind: input, shape index: {}]
  %s2 = inlined_call_operand.hbm [shape: f32[1,128], index: 2, kind: output, shape index: {}]
  %s3 = sld [smem:[#allocation0]]
  $region18: #{tpu_custom_call.1} parent=0
    _
  %s5 = ssub.s32 1, %s3
  %s6 = scalar_select 0, %s5, %s3
  %7 = sst [smem:[#allocation2]] %s0
  $region1: #{tpu_custom_call.1} parent=0
    #allocation3 [shape = 'u8[512]{0}', space=vmem, size = 0x400, scoped, tag = 'output window, operand 0, single buffered']
    #allocation4 [shape = 's32[1]{0}', space=sflag, size = 0x4, scoped, tag = 'scoped memory for tpu_custom_call.1']
    %8 = vsyncpa [#allocation4], 0
    // Predicated region
    $region2: #{tpu_custom_call.1} parent=1 // pred_check
      _
    $region3: #{tpu_custom_call.1} parent=1 // pred_check_branch
      %10 = sbr.rel (0) target = $region5
    $region4: #{tpu_custom_call.1} parent=1 // pred_region
      _
    $region5: #{tpu_custom_call.1} parent=1 // pred_fallthru
      _
    // Predicated region
    $region6: #{tpu_custom_call.1} parent=1 // pred_check
      _
    $region7: #{tpu_custom_call.1} parent=1 // pred_check_branch
      %12 = sbr.rel (0) target = $region9
    $region8: #{tpu_custom_call.1} parent=1 // pred_region
      _
    $region9: #{tpu_custom_call.1} parent=1 // pred_fallthru
      _
    %s13 = sld [smem:[#allocation2]]
    %v14 = vld [vmem:[%s1] sm:$0x1]
    %v15 = vstv %s13
    %v16 = vmul.f32 %v14, %v15
    %17 = vst [vmem:[#allocation3] sm:$0x1] %v16
    // Predicated region
    $region10: #{tpu_custom_call.1} parent=1 // pred_check
      _
    $region11: #{tpu_custom_call.1} parent=1 // pred_check_branch
      %19 = sbr.rel (0) target = $region13
    $region12: #{tpu_custom_call.1} parent=1 // pred_region
      %s21 = ssub.s32 16, 16
      %22 = vsyncadd [#allocation4], %s21
      %s24 = sshll.u32 [#allocation3], 4
      %s25 = int_to_ptr.vmem [resolvable:$true] %s24
      %27 = dma.vmem_to_hbm [thread:$0]  %s25, 16, %s2, [#allocation4]
    $region13: #{tpu_custom_call.1} parent=1 // pred_fallthru
      _
    // Predicated region
    $region14: #{tpu_custom_call.1} parent=1 // pred_check
      _
    $region15: #{tpu_custom_call.1} parent=1 // pred_check_branch
      %29 = sbr.rel (0) target = $region17
    $region16: #{tpu_custom_call.1} parent=1 // pred_region
      %30 = dma.done [#allocation4], 16
    $region17: #{tpu_custom_call.1} parent=1 // pred_fallthru
      _
    %31 = vsyncpa [#allocation4], 1

</llo_original>
